<compile_context>
chip_gen: v6e
topology: v6e:2x2x1
jax: 0.10.0
libtpu: 0.0.40
codegen_flags: <defaults>
</compile_context>

<pallas_src>
import functools

import jax
import jax.numpy as jnp
from jax.experimental import pallas as pl
from jax.experimental.pallas import tpu as pltpu


_MIB = 1024 * 1024


def _round_up(x, m):
    return ((x + m - 1) // m) * m


def _physical_vmem_bytes():
    """Best-effort physical VMEM query; falls back to v7x's 64 MiB (smallest)."""
    try:
        info = pltpu.get_tpu_info()
        for attr in ("vmem_capacity_bytes", "vmem_size_bytes", "vmem_bytes"):
            v = getattr(info, attr, None)
            if v:
                return int(v)
    except Exception:
        pass
    return 64 * _MIB


def _footprint_bytes(tm, tk, tn, x_itemsize, w_itemsize):
    """Double-buffered per-step VMEM footprint of the auto-pipeline."""
    return (2 * tm * tk * x_itemsize      # activations (f32, cast in kernel)
            + 2 * tk * tn * w_itemsize    # weight tile (compute dtype)
            + 2 * 1 * tn * 4              # bias
            + 2 * tm * tn * 4)            # f32 output block (accumulator)


def _choose_tiles(M, Vp, N, x_itemsize, w_itemsize, budget):
    """Pick (tm, tn, tk) under the VMEM budget and TPU (8,128) block rules."""
    tn = N  # full d_model: lane-dense output, no j axis, x read exactly once

    tm_cap = min(512, _round_up(max(M, 1), 16))  # multiple of 16 for bf16 rows
    tm_candidates = [c for c in (512, 256, 128, 64, 32, 16) if c <= tm_cap]
    if tm_cap not in tm_candidates:
        tm_candidates.insert(0, tm_cap)

    # Prefer the weight-resident layout (single K step => weight + bias DMA'd
    # exactly once for the whole kernel) whenever it fits the VMEM budget.
    if _footprint_bytes(min(tm_cap, 128), Vp, tn, x_itemsize, w_itemsize) <= budget:
        tk = Vp
    else:
        tk = 512
        for cand in (2048, 1024, 512):
            if Vp % cand == 0:      # Vp is padded to a 512 multiple at init
                tk = cand
                break

    for tm in tm_candidates:
        if _footprint_bytes(tm, tk, tn, x_itemsize, w_itemsize) <= budget:
            return tm, tn, tk
    return 16, tn, tk


def _linear_bias_kernel(x_ref, w_ref, b_ref, o_ref):
    """One (tm, N) output block, accumulated directly in o_ref over the K axis."""
    k = pl.program_id(1)

    @pl.when(k == 0)
    def _init():
        # Fold the bias into the init of the resident f32 output block.
        o_ref[...] = jnp.broadcast_to(b_ref[...], o_ref.shape).astype(o_ref.dtype)

    # In-kernel cast to the compute dtype (VPU has plenty of slack in this
    # MXU/DMA-dominated kernel); avoids a separate HBM pass for the cast.
    x = x_ref[...].astype(w_ref.dtype)
    o_ref[...] += jnp.dot(x, w_ref[...], preferred_element_type=jnp.float32)


@functools.partial(jax.jit, static_argnames=("tm", "tn", "tk", "vmem_limit"))
def _pallas_linear(x2d, w_t, bias2d, *, tm, tn, tk, vmem_limit):
    """x2d @ w_t + bias2d with f32 accumulation, f32 output.

    x2d:    (M, Vp) float32 (cast to w_t.dtype inside the kernel)
    w_t:    (Vp, N) compute dtype (pre-transposed, pre-padded PyTorch weight)
    bias2d: (1, N)  float32
    """
    M, Vp = x2d.shape
    _, N = w_t.shape
    n_i = pl.cdiv(M, tm)
    n_k = pl.cdiv(Vp, tk)

    # Honest traffic estimate (advisory): weight is re-read per i-block only
    # when K is tiled; with a constant block index it is fetched once.
    w_reread = 1 if n_k == 1 else n_i
    bytes_accessed = (M * Vp * x2d.dtype.itemsize
                      + Vp * N * w_t.dtype.itemsize * w_reread
                      + N * bias2d.dtype.itemsize
                      + M * N * 4)

    return pl.pallas_call(
        _linear_bias_kernel,
        out_shape=jax.ShapeDtypeStruct((M, N), jnp.float32),
        grid_spec=pltpu.PrefetchScalarGridSpec(
            num_scalar_prefetch=0,
            grid=(n_i, n_k),                                   # reduction last
            in_specs=[
                pl.BlockSpec((tm, tk), lambda i, k: (i, k)),   # activations
                pl.BlockSpec((tk, tn), lambda i, k: (k, 0)),   # weight slice
                pl.BlockSpec((1, tn), lambda i, k: (0, 0)),    # bias (resident)
            ],
            out_specs=pl.BlockSpec((tm, tn), lambda i, k: (i, 0)),
        ),
        compiler_params=pltpu.CompilerParams(
            dimension_semantics=("parallel", "arbitrary"),
            vmem_limit_bytes=vmem_limit,
        ),
        cost_estimate=pl.CostEstimate(
            flops=2 * M * Vp * N, transcendentals=0,
            bytes_accessed=bytes_accessed),
    )(x2d, w_t, bias2d)


class MLPEncoderPallas:
    """JAX/Pallas port of HHMPN/lamp/Encoders.py::MLPEncoder forward pass."""

    def __init__(self, n_src_com_vocab, n_max_com_seq, n_src_lyr_vocab,
                 n_max_lyr_seq, n_layers=6, n_head=8, d_k=64, d_v=64,
                 d_word_vec=512, d_model=512, d_inner_hid=1024, onehot=False,
                 dropout=0.1, seed=0, compute_dtype=jnp.bfloat16):
        self.n_max_com_seq = n_max_com_seq
        self.n_max_lyr_seq = n_max_lyr_seq
        self.d_model = d_model
        self.compute_dtype = jnp.dtype(compute_dtype)

        key = jax.random.PRNGKey(seed)
        k_wc, k_bc, k_wl, k_bl = jax.random.split(key, 4)

        # PyTorch nn.Linear default init: U(-1/sqrt(fan_in), 1/sqrt(fan_in))
        def init_linear(kw, kb, fan_in, fan_out):
            bound = 1.0 / jnp.sqrt(jnp.float32(fan_in))
            w = jax.random.uniform(kw, (fan_out, fan_in), jnp.float32,
                                   -bound, bound)
            b = jax.random.uniform(kb, (fan_out,), jnp.float32, -bound, bound)
            return w, b

        # linear_com : (n_src_com_vocab -> d_model)  -- used as "linear1"
        w_com, b_com = init_linear(k_wc, k_bc, n_src_com_vocab, d_model)
        self.V = n_src_com_vocab
        self.w_com = w_com                               # (d_model, V) f32
        self.w_com_t = jnp.asarray(w_com.T)              # (V, d_model) f32
        self.b_com = b_com
        self.b_com2d = b_com.reshape(1, -1)              # (1, d_model) f32

        # VMEM budget: ~75% of physical (detected), conservative v7x fallback.
        self._vmem_budget = int(_physical_vmem_bytes() * 3 // 4)

        # One-time V padding: only needed if the weight-resident full-K layout
        # does not fit and V is not already a multiple of 512.  Zero-padded
        # weight rows (and zero-padded x columns) keep the result exact.
        w_isz = self.compute_dtype.itemsize
        full_k_fits = _footprint_bytes(128, self.V, d_model, 4, w_isz) <= self._vmem_budget
        if full_k_fits or self.V % 512 == 0:
            self.Vp = self.V
        else:
            self.Vp = _round_up(self.V, 512)

        w_t = self.w_com_t
        if self.Vp != self.V:
            w_t = jnp.pad(w_t, ((0, self.Vp - self.V), (0, 0)))
        self.w_com_t_c = w_t.astype(self.compute_dtype)  # (Vp, d_model)

        # linear_lyr : (n_src_lyr_vocab -> d_model)  -- defined but unused in fwd
        self.w_lyr, self.b_lyr = init_linear(k_wl, k_bl, n_src_lyr_vocab, d_model)

    def __call__(self, src_seq, adj=None, src_pos=None, return_attns=False):
        B, S, V = src_seq.shape
        M = B * S
        x2d = src_seq.reshape(M, V)  # stays f32; cast happens inside the kernel
        if self.Vp != V:
            # TODO(synk): fuse this zero-pad with the reshape in a custom prologue.
            x2d = jnp.pad(x2d, ((0, 0), (0, self.Vp - V)))

        w_isz = self.compute_dtype.itemsize
        tm, tn, tk = _choose_tiles(M, self.Vp, self.d_model, 4, w_isz,
                                   self._vmem_budget)
        fp = _footprint_bytes(tm, tk, tn, 4, w_isz)
        vmem_limit = int(min(self._vmem_budget, max(fp + 4 * _MIB, 16 * _MIB)))

        enc_output = _pallas_linear(
            x2d, self.w_com_t_c, self.b_com2d,
            tm=tm, tn=tn, tk=tk, vmem_limit=vmem_limit,
        )  # (B*S, d_model) float32

        # enc_output.view(src_seq.size(0), 1, -1)
        return enc_output.reshape(B, 1, S * self.d_model), None


if __name__ == "__main__":
    # Small, forward-consistent shapes.
    B, S = 2, 8
    n_src_com_vocab = 16
    n_src_lyr_vocab = 16
    d_model = 128

    enc = MLPEncoderPallas(
        n_src_com_vocab=n_src_com_vocab,
        n_max_com_seq=S,
        n_src_lyr_vocab=n_src_lyr_vocab,
        n_max_lyr_seq=S,
        d_model=d_model,
        seed=0,
    )

    key = jax.random.PRNGKey(0)
    src_seq = jax.random.normal(key, (B, S, n_src_com_vocab), jnp.float32)
    adj = jnp.zeros((B, S, S), jnp.float32)        # unused by forward
    src_pos = jnp.arange(S)[None, :].repeat(B, 0)  # unused by forward

    out, attns = enc(src_seq, adj, src_pos)
    out = jax.block_until_ready(out)

    assert out.shape == (B, 1, S * d_model), out.shape
    assert attns is None

    # Reference with the same bf16 compute / f32 accumulation as the kernel.
    x_c = src_seq.reshape(B * S, -1).astype(enc.compute_dtype)
    ref = (jnp.dot(x_c, enc.w_com_t_c[:n_src_com_vocab],
                   preferred_element_type=jnp.float32)
           + enc.b_com2d).reshape(B, 1, -1)
    assert jnp.allclose(out, ref, atol=2e-2, rtol=2e-2), \
        float(jnp.max(jnp.abs(out - ref)))

    # Looser sanity check vs the full-f32 reference (bf16 quantization noise).
    ref_f32 = (src_seq.reshape(B * S, -1) @ enc.w_com_t
               + enc.b_com2d).reshape(B, 1, -1)
    assert jnp.allclose(out, ref_f32, atol=5e-2, rtol=5e-2), \
        float(jnp.max(jnp.abs(out - ref_f32)))

    print("KERNEL_OK")
</pallas_src>

<mosaic_0001>
module attributes {stable_mosaic.version = 11 : i64} {
  func.func @_linear_bias_kernel(%arg0: i32, %arg1: i32, %arg2: memref<16x16xf32, #tpu.memory_space<vmem>>, %arg3: memref<16x128xbf16, #tpu.memory_space<vmem>>, %arg4: memref<1x128xf32, #tpu.memory_space<vmem>>, %arg5: memref<16x128xf32, #tpu.memory_space<vmem>>) attributes {dimension_semantics = [#tpu.dimension_semantics<parallel>, #tpu.dimension_semantics<arbitrary>], iteration_bounds = array<i64: 1, 1>, scalar_prefetch = 0 : i64, scratch_operands = 0 : i64, tpu.core_type = #tpu.core_type<tc>, window_params = [{transform_indices = @transform_0, window_bounds = array<i64: 16, 16>}, {transform_indices = @transform_1, window_bounds = array<i64: 16, 128>}, {pipeline_mode = #tpu.pipeline_mode<synchronous>, transform_indices = @transform_2, window_bounds = array<i64: 1, 128>}, {transform_indices = @transform_3, window_bounds = array<i64: 16, 128>}]} {
    %c0_i32 = arith.constant 0 : i32
    %0 = arith.cmpi eq, %arg1, %c0_i32 : i32
    %1 = arith.extui %0 : i1 to i32
    %c0_i32_0 = arith.constant 0 : i32
    %2 = arith.cmpi ne, %1, %c0_i32_0 : i32
    scf.if %2 {
      %c0_8 = arith.constant 0 : index
      %c0_9 = arith.constant 0 : index
      %10 = vector.load %arg4[%c0_8, %c0_9] : memref<1x128xf32, #tpu.memory_space<vmem>>, vector<1x128xf32>
      %11 = vector.shape_cast %10 : vector<1x128xf32> to vector<1x128xf32>
      %12 = vector.broadcast %11 : vector<1x128xf32> to vector<16x128xf32>
      %c0_10 = arith.constant 0 : index
      %c0_11 = arith.constant 0 : index
      %13 = vector.load %arg5[%c0_10, %c0_11] : memref<16x128xf32, #tpu.memory_space<vmem>>, vector<16x128xf32>
      tpu.vector_store %arg5[%c0_10, %c0_11], %12 {strides = array<i32>} : memref<16x128xf32, #tpu.memory_space<vmem>>, vector<16x128xf32>,
    } else {
    }
    %c0 = arith.constant 0 : index
    %c0_1 = arith.constant 0 : index
    %3 = vector.load %arg2[%c0, %c0_1] : memref<16x16xf32, #tpu.memory_space<vmem>>, vector<16x16xf32>
    %4 = arith.truncf %3 : vector<16x16xf32> to vector<16x16xbf16>
    %c0_2 = arith.constant 0 : index
    %c0_3 = arith.constant 0 : index
    %5 = vector.load %arg5[%c0_2, %c0_3] : memref<16x128xf32, #tpu.memory_space<vmem>>, vector<16x128xf32>
    %c0_4 = arith.constant 0 : index
    %c0_5 = arith.constant 0 : index
    %6 = vector.load %arg3[%c0_4, %c0_5] : memref<16x128xbf16, #tpu.memory_space<vmem>>, vector<16x128xbf16>
    %cst = arith.constant dense<0.000000e+00> : vector<16x128xf32>
    %7 = tpu.matmul %4, %6, %cst {dimension_numbers = #tpu.dot_dimension_numbers<[1], [0], [0], [1], [0, 0, 1, 1], [], []>} : vector<16x16xbf16>, vector<16x128xbf16>, vector<16x128xf32> -> vector<16x128xf32>
    %8 = arith.addf %5, %7 : vector<16x128xf32>
    %c0_6 = arith.constant 0 : index
    %c0_7 = arith.constant 0 : index
    %9 = vector.load %arg5[%c0_6, %c0_7] : memref<16x128xf32, #tpu.memory_space<vmem>>, vector<16x128xf32>
    tpu.vector_store %arg5[%c0_6, %c0_7], %8 {strides = array<i32>} : memref<16x128xf32, #tpu.memory_space<vmem>>, vector<16x128xf32>,
    return
  }
  func.func @transform_0(%arg0: i32, %arg1: i32) -> (i32, i32) {
    %c0_i32 = arith.constant 0 : i32
    return %arg0, %arg1 : i32, i32
  }
  func.func @transform_1(%arg0: i32, %arg1: i32) -> (i32, i32) {
    %c0_i32 = arith.constant 0 : i32
    %c0_i32_0 = arith.constant 0 : i32
    return %arg1, %c0_i32 : i32, i32
  }
  func.func @transform_2(%arg0: i32, %arg1: i32) -> (i32, i32) {
    %c0_i32 = arith.constant 0 : i32
    %c0_i32_0 = arith.constant 0 : i32
    %c0_i32_1 = arith.constant 0 : i32
    return %c0_i32, %c0_i32_0 : i32, i32
  }
  func.func @transform_3(%arg0: i32, %arg1: i32) -> (i32, i32) {
    %c0_i32 = arith.constant 0 : i32
    %c0_i32_0 = arith.constant 0 : i32
    return %arg0, %c0_i32 : i32, i32
  }
}

</mosaic_0001>

<llo_original>
// kernel: _pallas_linear.1
$region0: #{_pallas_linear.1}
  #allocation0 [shape = 'u32[]', space=smem, size = 0x4, offset = 0x4, fixed_abs, tag = 'smem constant byte address 0x4 - core index']
  #allocation1 [shape = 'u32[144,128]{1,0:T(1,128)}', space=vmem, size = 0x12000, scoped, tag = 'internal scratch']
  %s0 = inlined_call_operand.hbm [shape: f32[16,16], index: 0, kind: input, shape index: {}]
  %s1 = inlined_call_operand.hbm [shape: bf16[16,128], index: 1, kind: input, shape index: {}]
  %s2 = inlined_call_operand.vmem [shape: f32[1,128], index: 2, kind: input, shape index: {}]
  %s3 = inlined_call_operand.hbm [shape: f32[16,128], index: 3, kind: output, shape index: {}]
  %s4 = sld [smem:[#allocation0]]
  $region34: #{_pallas_linear.1} parent=0
    _
  %s6 = ssub.s32 1, %s4
  %s7 = scalar_select 0, %s6, %s4
  $region1: #{_pallas_linear.1} parent=0
    #allocation2 [shape = 'u8[8192]{0}', space=vmem, size = 0x2000, scoped, tag = 'input window, operand 0, single buffered']
    #allocation3 [shape = 's32[1]{0}', space=sflag, size = 0x4, scoped, tag = 'scoped memory for _pallas_linear.1']
    #allocation4 [shape = 's32[1]{0}', space=sflag, size = 0x4, scoped, tag = 'scoped memory for _pallas_linear.1']
    #allocation5 [shape = 'u8[4096]{0}', space=vmem, size = 0x1000, scoped, tag = 'input window, operand 1, single buffered']
    #allocation6 [shape = 's32[1]{0}', space=sflag, size = 0x4, scoped, tag = 'scoped memory for _pallas_linear.1']
    #allocation7 [shape = 'u8[8192]{0}', space=vmem, size = 0x2000, scoped, tag = 'output window, operand 0, single buffered']
    %8 = vsyncpa [#allocation3], 0
    %9 = vsyncpa [#allocation6], 0
    %10 = vsyncpa [#allocation4], 0
    // Predicated region
    $region2: #{_pallas_linear.1} parent=1 // pred_check
      _
    $region3: #{_pallas_linear.1} parent=1 // pred_check_branch
      %12 = sbr.rel (0) target = $region5
    $region4: #{_pallas_linear.1} parent=1 // pred_region
      %s14 = ssub.s32 256, 256
      %15 = vsyncadd [#allocation3], %s14
      %s16 = sshll.u32 [#allocation2], 4
      %s17 = int_to_ptr.vmem [resolvable:$true] %s16
      %22 = dma.hbm_to_vmem [thread:$0]  %s0, 256, %s17, [#allocation3], 128, 128, 8
    $region5: #{_pallas_linear.1} parent=1 // pred_fallthru
      _
    // Predicated region
    $region6: #{_pallas_linear.1} parent=1 // pred_check
      _
    $region7: #{_pallas_linear.1} parent=1 // pred_check_branch
      %24 = sbr.rel (0) target = $region9
    $region8: #{_pallas_linear.1} parent=1 // pred_region
      %s26 = ssub.s32 128, 128
      %27 = vsyncadd [#allocation6], %s26
      %s28 = sshll.u32 [#allocation5], 4
      %s29 = int_to_ptr.vmem [resolvable:$true] %s28
      %34 = dma.hbm_to_vmem [thread:$0]  %s1, 128, %s29, [#allocation6], 64, 64, 4
    $region9: #{_pallas_linear.1} parent=1 // pred_fallthru
      _
    // Predicated region
    $region10: #{_pallas_linear.1} parent=1 // pred_check
      _
    $region11: #{_pallas_linear.1} parent=1 // pred_check_branch
      %36 = sbr.rel (0) target = $region13
    $region12: #{_pallas_linear.1} parent=1 // pred_region
      _
    $region13: #{_pallas_linear.1} parent=1 // pred_fallthru
      _
    // Predicated region
    $region14: #{_pallas_linear.1} parent=1 // pred_check
      _
    $region15: #{_pallas_linear.1} parent=1 // pred_check_branch
      %38 = sbr.rel (0) target = $region17
    $region16: #{_pallas_linear.1} parent=1 // pred_region
      %39 = dma.done [#allocation3], 256
    $region17: #{_pallas_linear.1} parent=1 // pred_fallthru
      _
    // Predicated region
    $region18: #{_pallas_linear.1} parent=1 // pred_check
      _
    $region19: #{_pallas_linear.1} parent=1 // pred_check_branch
      %41 = sbr.rel (0) target = $region21
    $region20: #{_pallas_linear.1} parent=1 // pred_region
      %42 = dma.done [#allocation6], 128
    $region21: #{_pallas_linear.1} parent=1 // pred_fallthru
      _
    %p44 = scmp.eq.s32.totalorder 0, 0
    // Predicated region
    $region22: #{_pallas_linear.1} parent=1 // pred_check
      %p45 = pneg %p44
    $region23: #{_pallas_linear.1} parent=1 // pred_check_branch
      %47 = sbr.rel (%p45) target = $region25
    $region24: #{_pallas_linear.1} parent=1 // pred_region
      %v48 = vld [vmem:[%s2] sm:$0x1]
      %v50 = vlaneseq
      %v51 = vshrl.u32 %v50, 7
      %v52 = vsub.s32 0, %v51
      %v53 = vrot.slane %v48, %v52
      %55 = vst [vmem:[#allocation7] sm:$0xff] %v53
      %56 = vst [vmem:[#allocation7 + $0x8] sm:$0xff] %v53
    $region25: #{_pallas_linear.1} parent=1 // pred_fallthru
      _
    %v57 = vld [vmem:[#allocation2] sm:$0xff]
    %v58 = vld [vmem:[#allocation2 + $0x8] sm:$0xff]
    %v59 = vpack.c.bf16 %v58, %v57
    %v60 = vld [vmem:[#allocation7] sm:$0xff]
    %v61 = vld [vmem:[#allocation7 + $0x8] sm:$0xff]
    %v62 = vld [vmem:[#allocation5] sm:$0xf]
    %v63 = vld [vmem:[#allocation5 + $0x4] sm:$0xf]
    %v66 = vunpack.c.l.b16 %v62
    %v67 = vunpack.c.l.b16 %v63
    %v68 = vpack.c.b16 %v67, %v66
    %vm70 = vcmask 130048
    %v72 = vsel %vm70, %v59, 0
    %74 = vmatprep.subr.bf16.mxu0 0
    %75 = vmatpush1.bf16.msra.mxu0 0
    %76 = vmatprep.subr.bf16.mxu0 0
    %77 = vmatpush1.bf16.msra.mxu0 0
    %78 = vmatprep.subr.bf16.mxu0 0
    %79 = vmatpush1.bf16.msra.mxu0 0
    %80 = vmatprep.subr.bf16.mxu0 0
    %81 = vmatpush1.bf16.msra.mxu0 0
    %82 = vmatprep.subr.bf16.mxu0 0
    %83 = vmatpush1.bf16.msra.mxu0 0
    %84 = vmatprep.subr.bf16.mxu0 0
    %85 = vmatpush1.bf16.msra.mxu0 0
    %86 = vmatprep.subr.bf16.mxu0 0
    %87 = vmatpush1.bf16.msra.mxu0 0
    %88 = vmatprep.subr.bf16.mxu0 0
    %89 = vmatpush1.bf16.msra.mxu0 %v68
    %90 = vmatprep.subr.bf16.mxu0 0
    %91 = vmatpush2.bf16.msra.mxu0 0
    %92 = vmatprep.subr.bf16.mxu0 0
    %93 = vmatpush2.bf16.msra.mxu0 0
    %94 = vmatprep.subr.bf16.mxu0 0
    %95 = vmatpush2.bf16.msra.mxu0 0
    %96 = vmatprep.subr.bf16.mxu0 0
    %97 = vmatpush2.bf16.msra.mxu0 0
    %98 = vmatprep.subr.bf16.mxu0 0
    %99 = vmatpush2.bf16.msra.mxu0 0
    %100 = vmatprep.subr.bf16.mxu0 0
    %101 = vmatpush2.bf16.msra.mxu0 0
    %102 = vmatprep.subr.bf16.mxu0 0
    %103 = vmatpush2.bf16.msra.mxu0 0
    %104 = vmatprep.subr.bf16.mxu0 0
    %105 = vmatpush2.bf16.msra.mxu0 0
    %106 = vmatprep.mubr.bf16.mxu0 0
    %107 = vmatmul.mubr.bf16.gmra.mxu0 %v72
    %v108 = vpop.f32.mrf.mxu0
    %v109 = vadd.f32 0.0, %v108
    %v110 = vpop.f32.mrf.mxu0
    %v111 = vpop.f32.mrf.mxu0
    %v112 = vadd.f32 0.0, %v111
    %v113 = vpop.f32.mrf.mxu0
    %114 = vdwg.mxu0
    %v115 = vadd.f32 %v60, %v109
    %v116 = vadd.f32 %v61, %v112
    %117 = vst [vmem:[#allocation7] sm:$0xff] %v115
    %118 = vst [vmem:[#allocation7 + $0x8] sm:$0xff] %v116
    // Predicated region
    $region26: #{_pallas_linear.1} parent=1 // pred_check
      _
    $region27: #{_pallas_linear.1} parent=1 // pred_check_branch
      %120 = sbr.rel (0) target = $region29
    $region28: #{_pallas_linear.1} parent=1 // pred_region
      %s122 = ssub.s32 256, 256
      %123 = vsyncadd [#allocation4], %s122
      %s124 = sshll.u32 [#allocation7], 4
      %s125 = int_to_ptr.vmem [resolvable:$true] %s124
      %130 = dma.vmem_to_hbm [thread:$0]  %s125, 256, %s3, [#allocation4], 128, 128, 8
    $region29: #{_pallas_linear.1} parent=1 // pred_fallthru
      _
    // Predicated region
    $region30: #{_pallas_linear.1} parent=1 // pred_check
      _
    $region31: #{_pallas_linear.1} parent=1 // pred_check_branch
      %132 = sbr.rel (0) target = $region33
    $region32: #{_pallas_linear.1} parent=1 // pred_region
      %133 = dma.done [#allocation4], 256
    $region33: #{_pallas_linear.1} parent=1 // pred_fallthru
      _
    %134 = vsyncpa [#allocation3], 1
    %135 = vsyncpa [#allocation6], 1
    %136 = vsyncpa [#allocation4], 1

</llo_original>
